<compile_context>
chip_gen: v5e
topology: v5e:2x2
jax: 0.10.0
libtpu: 0.0.40
codegen_flags: <defaults>
</compile_context>

<pallas_src>
import math
from functools import partial

import jax
import jax.numpy as jnp
from jax.experimental import pallas as pl
from jax.experimental.pallas import tpu as pltpu

_LANE = 128


def _round_up(x, m):
    return (x + m - 1) // m * m


def _mlp_kernel(x_ref, *refs, num_layers):
    """refs = (w0, b0, w1, b1, ..., w_{L-1}, b_{L-1}, out_ref).

    x_ref : (TM, D_in)            row tile of the flattened input
    w_i   : (D_prev_p, D_i_p)     pre-transposed, bf16, 128-lane padded, resident
    b_i   : (1, D_i_p)            f32, 128-lane padded, resident
    out   : (TM, D_out_p)         lane-dense (unmasked) store
    """
    out_ref = refs[-1]
    wb = refs[:-1]

    # Layer 0: cast the input tile straight to bf16 (no f32 round trip).
    h = jnp.dot(x_ref[...].astype(jnp.bfloat16), wb[0][...],
                preferred_element_type=jnp.float32) + wb[1][...]
    for i in range(1, num_layers):
        h = jnp.maximum(h, 0.0)                              # ReLU on hidden layers
        h = jnp.dot(h.astype(jnp.bfloat16), wb[2 * i][...],
                    preferred_element_type=jnp.float32) + wb[2 * i + 1][...]
    out_ref[...] = h.astype(out_ref.dtype)


def prepare_mlp_params(params):
    """One-time host-side prep (call once, reuse across forward calls).

    params : {"weights": [(out_i, in_i), ...],   # PyTorch nn.Linear layout
              "biases":  [(out_i,), ...]}
    Transposes weights to (in, out), casts to bf16, and zero-pads every
    layer's feature width (and hidden input width) to a multiple of 128 lanes.
    Padding is mathematically identity (zero rows/cols).
    """
    weights = params["weights"]
    biases = params["biases"]
    num_layers = len(weights)
    d_in = weights[0].shape[1]
    d_out = weights[-1].shape[0]

    w_list, b_list = [], []
    for i, (w, b) in enumerate(zip(weights, biases)):
        n_out, n_in = w.shape
        in_p = n_in if i == 0 else _round_up(n_in, _LANE)   # layer 0's K is x's last dim
        out_p = _round_up(n_out, _LANE)
        wt = jnp.zeros((in_p, out_p), jnp.bfloat16)
        wt = wt.at[:n_in, :n_out].set(jnp.transpose(w).astype(jnp.bfloat16))
        bp = jnp.zeros((1, out_p), jnp.float32)
        bp = bp.at[0, :n_out].set(b.astype(jnp.float32))
        w_list.append(wt)
        b_list.append(bp)

    return {
        "w": tuple(w_list),
        "b": tuple(b_list),
        "num_layers": num_layers,
        "d_in": d_in,
        "d_out": d_out,
        "d_out_padded": _round_up(d_out, _LANE),
    }


def mlp_forward(x, params, *, row_tile=512):
    """Fused MLP forward.

    x      : (..., input_dim) float array.
    params : output of prepare_mlp_params(), or raw {"weights", "biases"}
             (raw params are prepared on the fly; prefer preparing once).
    returns: (..., output_dim), dtype of x.
    """
    if "weights" in params:                      # convenience path
        params = prepare_mlp_params(params)

    num_layers = params["num_layers"]
    d_in = params["d_in"]
    d_out = params["d_out"]
    d_out_p = params["d_out_padded"]
    assert x.shape[-1] == d_in

    lead_shape = x.shape[:-1]
    x2 = x.reshape(-1, d_in)                     # flatten leading dims (free, no transpose)
    m = x2.shape[0]

    # Balanced row tiles: < 8 rows of padding per tile, tm a multiple of 8.
    num_tiles = int(pl.cdiv(m, row_tile))
    if num_tiles < 2 and m >= 16:
        num_tiles = 2                            # keep >= 2 grid steps for the 2 v7x TCs
    tm = _round_up(int(pl.cdiv(m, num_tiles)), 8)
    m_pad = tm * num_tiles
    if m_pad != m:
        x2 = jnp.pad(x2, ((0, m_pad - m), (0, 0)))

    flat_wb = []
    for w, b in zip(params["w"], params["b"]):
        flat_wb.extend([w, b])

    in_specs = [pl.BlockSpec((tm, d_in), lambda i: (i, 0))]          # x row tile
    for w, b in zip(params["w"], params["b"]):
        in_specs.append(pl.BlockSpec(w.shape, lambda i: (0, 0)))     # VMEM-resident weight
        in_specs.append(pl.BlockSpec(b.shape, lambda i: (0, 0)))     # VMEM-resident bias

    out_dtype = x.dtype

    # Scoped-VMEM budget (v5e default is only 16 MiB): double-buffered x/out
    # tiles + (double-buffered) resident weights/biases + activation headroom.
    widest = max(w.shape[1] for w in params["w"])
    vmem_need = 2 * tm * d_in * x2.dtype.itemsize
    vmem_need += 2 * tm * d_out_p * jnp.dtype(out_dtype).itemsize
    vmem_need += 2 * sum(w.shape[0] * w.shape[1] * 2 for w in params["w"])
    vmem_need += 2 * sum(b.shape[1] * 4 for b in params["b"])
    vmem_need += 4 * tm * widest * 4
    vmem_limit = int(min(max(2 * vmem_need, 32 * 1024 * 1024), 60 * 1024 * 1024))

    out = pl.pallas_call(
        partial(_mlp_kernel, num_layers=num_layers),
        out_shape=jax.ShapeDtypeStruct((m_pad, d_out_p), out_dtype),
        grid_spec=pltpu.PrefetchScalarGridSpec(
            num_scalar_prefetch=0,
            grid=(num_tiles,),
            in_specs=in_specs,
            out_specs=pl.BlockSpec((tm, d_out_p), lambda i: (i, 0)),
        ),
        compiler_params=pltpu.CompilerParams(
            dimension_semantics=("parallel",),
            vmem_limit_bytes=vmem_limit),
    )(x2, *flat_wb)

    return out[:m, :d_out].reshape(*lead_shape, d_out)


def init_params(key, input_dim, hidden_dim, output_dim, num_layers):
    """Matches nn.Linear parameter shapes ((out, in) weight, (out,) bias)."""
    dims = [input_dim] + [hidden_dim] * (num_layers - 1) + [output_dim]
    weights, biases = [], []
    for n_in, n_out in zip(dims[:-1], dims[1:]):
        key, kw, kb = jax.random.split(key, 3)
        bound = 1.0 / math.sqrt(n_in)
        weights.append(jax.random.uniform(kw, (n_out, n_in), jnp.float32,
                                          minval=-bound, maxval=bound))
        biases.append(jax.random.uniform(kb, (n_out,), jnp.float32,
                                         minval=-bound, maxval=bound))
    return {"weights": weights, "biases": biases}


def _reference(x, params):
    """Pure-JAX (f32) reference of MLP.forward for verification."""
    h = x
    n = len(params["weights"])
    for i, (w, b) in enumerate(zip(params["weights"], params["biases"])):
        h = h @ w.T + b
        if i < n - 1:
            h = jnp.maximum(h, 0.0)
    return h


if __name__ == "__main__":
    input_dim, hidden_dim, output_dim, num_layers = 32, 64, 32, 3
    batch, seq = 2, 8

    key = jax.random.PRNGKey(0)
    k_p, k_x = jax.random.split(key)
    params = init_params(k_p, input_dim, hidden_dim, output_dim, num_layers)
    x = jax.random.normal(k_x, (batch, seq, input_dim), jnp.float32)

    prepared = prepare_mlp_params(params)       # one-time weight prep (hoisted)
    out = mlp_forward(x, prepared)
    out = jax.block_until_ready(out)

    ref = _reference(x, params)
    assert out.shape == (batch, seq, output_dim)
    # bf16 matmul operands (f32 accumulation) -> loosened tolerance vs f32 ref.
    assert jnp.allclose(out, ref, atol=3e-2, rtol=3e-2), "mismatch vs reference"

    print("KERNEL_OK")
</pallas_src>

<mosaic_0001>
module attributes {stable_mosaic.version = 11 : i64} {
  func.func @_mlp_kernel(%arg0: i32, %arg1: memref<8x32xf32, #tpu.memory_space<vmem>>, %arg2: memref<32x128xbf16, #tpu.memory_space<vmem>>, %arg3: memref<1x128xf32, #tpu.memory_space<vmem>>, %arg4: memref<128x128xbf16, #tpu.memory_space<vmem>>, %arg5: memref<1x128xf32, #tpu.memory_space<vmem>>, %arg6: memref<128x128xbf16, #tpu.memory_space<vmem>>, %arg7: memref<1x128xf32, #tpu.memory_space<vmem>>, %arg8: memref<8x128xf32, #tpu.memory_space<vmem>>) attributes {dimension_semantics = [#tpu.dimension_semantics<parallel>], iteration_bounds = array<i64: 2>, scalar_prefetch = 0 : i64, scratch_operands = 0 : i64, tpu.core_type = #tpu.core_type<tc>, window_params = [{transform_indices = @transform_0, window_bounds = array<i64: 8, 32>}, {pipeline_mode = #tpu.pipeline_mode<synchronous>, transform_indices = @transform_1, window_bounds = array<i64: 32, 128>}, {pipeline_mode = #tpu.pipeline_mode<synchronous>, transform_indices = @transform_2, window_bounds = array<i64: 1, 128>}, {pipeline_mode = #tpu.pipeline_mode<synchronous>, transform_indices = @transform_3, window_bounds = array<i64: 128, 128>}, {pipeline_mode = #tpu.pipeline_mode<synchronous>, transform_indices = @transform_4, window_bounds = array<i64: 1, 128>}, {pipeline_mode = #tpu.pipeline_mode<synchronous>, transform_indices = @transform_5, window_bounds = array<i64: 128, 128>}, {pipeline_mode = #tpu.pipeline_mode<synchronous>, transform_indices = @transform_6, window_bounds = array<i64: 1, 128>}, {transform_indices = @transform_7, window_bounds = array<i64: 8, 128>}]} {
    %c0 = arith.constant 0 : index
    %c0_0 = arith.constant 0 : index
    %0 = vector.load %arg1[%c0, %c0_0] : memref<8x32xf32, #tpu.memory_space<vmem>>, vector<8x32xf32>
    %1 = arith.truncf %0 : vector<8x32xf32> to vector<8x32xbf16>
    %c0_1 = arith.constant 0 : index
    %c0_2 = arith.constant 0 : index
    %2 = vector.load %arg2[%c0_1, %c0_2] : memref<32x128xbf16, #tpu.memory_space<vmem>>, vector<32x128xbf16>
    %cst = arith.constant dense<0.000000e+00> : vector<8x128xf32>
    %3 = tpu.matmul %1, %2, %cst {dimension_numbers = #tpu.dot_dimension_numbers<[1], [0], [0], [1], [0, 0, 1, 1], [], []>} : vector<8x32xbf16>, vector<32x128xbf16>, vector<8x128xf32> -> vector<8x128xf32>
    %c0_3 = arith.constant 0 : index
    %c0_4 = arith.constant 0 : index
    %4 = vector.load %arg3[%c0_3, %c0_4] : memref<1x128xf32, #tpu.memory_space<vmem>>, vector<1x128xf32>
    %5 = vector.broadcast %4 : vector<1x128xf32> to vector<8x128xf32>
    %6 = arith.addf %3, %5 : vector<8x128xf32>
    %cst_5 = arith.constant 0.000000e+00 : f32
    %7 = vector.broadcast %cst_5 : f32 to vector<8x128xf32>
    %8 = arith.maximumf %6, %7 : vector<8x128xf32>
    %9 = arith.truncf %8 : vector<8x128xf32> to vector<8x128xbf16>
    %c0_6 = arith.constant 0 : index
    %c0_7 = arith.constant 0 : index
    %10 = vector.load %arg4[%c0_6, %c0_7] : memref<128x128xbf16, #tpu.memory_space<vmem>>, vector<128x128xbf16>
    %cst_8 = arith.constant dense<0.000000e+00> : vector<8x128xf32>
    %11 = tpu.matmul %9, %10, %cst_8 {dimension_numbers = #tpu.dot_dimension_numbers<[1], [0], [0], [1], [0, 0, 1, 1], [], []>} : vector<8x128xbf16>, vector<128x128xbf16>, vector<8x128xf32> -> vector<8x128xf32>
    %c0_9 = arith.constant 0 : index
    %c0_10 = arith.constant 0 : index
    %12 = vector.load %arg5[%c0_9, %c0_10] : memref<1x128xf32, #tpu.memory_space<vmem>>, vector<1x128xf32>
    %13 = vector.broadcast %12 : vector<1x128xf32> to vector<8x128xf32>
    %14 = arith.addf %11, %13 : vector<8x128xf32>
    %cst_11 = arith.constant 0.000000e+00 : f32
    %15 = vector.broadcast %cst_11 : f32 to vector<8x128xf32>
    %16 = arith.maximumf %14, %15 : vector<8x128xf32>
    %17 = arith.truncf %16 : vector<8x128xf32> to vector<8x128xbf16>
    %c0_12 = arith.constant 0 : index
    %c0_13 = arith.constant 0 : index
    %18 = vector.load %arg6[%c0_12, %c0_13] : memref<128x128xbf16, #tpu.memory_space<vmem>>, vector<128x128xbf16>
    %cst_14 = arith.constant dense<0.000000e+00> : vector<8x128xf32>
    %19 = tpu.matmul %17, %18, %cst_14 {dimension_numbers = #tpu.dot_dimension_numbers<[1], [0], [0], [1], [0, 0, 1, 1], [], []>} : vector<8x128xbf16>, vector<128x128xbf16>, vector<8x128xf32> -> vector<8x128xf32>
    %c0_15 = arith.constant 0 : index
    %c0_16 = arith.constant 0 : index
    %20 = vector.load %arg7[%c0_15, %c0_16] : memref<1x128xf32, #tpu.memory_space<vmem>>, vector<1x128xf32>
    %21 = vector.broadcast %20 : vector<1x128xf32> to vector<8x128xf32>
    %22 = arith.addf %19, %21 : vector<8x128xf32>
    %c0_17 = arith.constant 0 : index
    %c0_18 = arith.constant 0 : index
    %23 = vector.load %arg8[%c0_17, %c0_18] : memref<8x128xf32, #tpu.memory_space<vmem>>, vector<8x128xf32>
    tpu.vector_store %arg8[%c0_17, %c0_18], %22 {strides = array<i32>} : memref<8x128xf32, #tpu.memory_space<vmem>>, vector<8x128xf32>,
    return
  }
  func.func @transform_0(%arg0: i32) -> (i32, i32) {
    %c0_i32 = arith.constant 0 : i32
    %c0_i32_0 = arith.constant 0 : i32
    return %arg0, %c0_i32 : i32, i32
  }
  func.func @transform_1(%arg0: i32) -> (i32, i32) {
    %c0_i32 = arith.constant 0 : i32
    %c0_i32_0 = arith.constant 0 : i32
    %c0_i32_1 = arith.constant 0 : i32
    return %c0_i32, %c0_i32_0 : i32, i32
  }
  func.func @transform_2(%arg0: i32) -> (i32, i32) {
    %c0_i32 = arith.constant 0 : i32
    %c0_i32_0 = arith.constant 0 : i32
    %c0_i32_1 = arith.constant 0 : i32
    return %c0_i32, %c0_i32_0 : i32, i32
  }
  func.func @transform_3(%arg0: i32) -> (i32, i32) {
    %c0_i32 = arith.constant 0 : i32
    %c0_i32_0 = arith.constant 0 : i32
    %c0_i32_1 = arith.constant 0 : i32
    return %c0_i32, %c0_i32_0 : i32, i32
  }
  func.func @transform_4(%arg0: i32) -> (i32, i32) {
    %c0_i32 = arith.constant 0 : i32
    %c0_i32_0 = arith.constant 0 : i32
    %c0_i32_1 = arith.constant 0 : i32
    return %c0_i32, %c0_i32_0 : i32, i32
  }
  func.func @transform_5(%arg0: i32) -> (i32, i32) {
    %c0_i32 = arith.constant 0 : i32
    %c0_i32_0 = arith.constant 0 : i32
    %c0_i32_1 = arith.constant 0 : i32
    return %c0_i32, %c0_i32_0 : i32, i32
  }
  func.func @transform_6(%arg0: i32) -> (i32, i32) {
    %c0_i32 = arith.constant 0 : i32
    %c0_i32_0 = arith.constant 0 : i32
    %c0_i32_1 = arith.constant 0 : i32
    return %c0_i32, %c0_i32_0 : i32, i32
  }
  func.func @transform_7(%arg0: i32) -> (i32, i32) {
    %c0_i32 = arith.constant 0 : i32
    %c0_i32_0 = arith.constant 0 : i32
    return %arg0, %c0_i32 : i32, i32
  }
}

</mosaic_0001>

<llo_original>
// kernel: tpu_custom_call.1
$region0: #{tpu_custom_call.1}
  #allocation0 [shape = 'u32[]', space=smem, size = 0x4, offset = 0x4, fixed_abs, tag = 'smem constant byte address 0x4 - core index']
  #allocation1 [shape = 'u32[72,128]{1,0:T(1,128)}', space=vmem, size = 0x9000, scoped, tag = 'internal scratch']
  %s0 = inlined_call_operand.hbm [shape: f32[16,32], index: 0, kind: input, shape index: {}]
  %s1 = inlined_call_operand.hbm [shape: bf16[32,128], index: 1, kind: input, shape index: {}]
  %s2 = inlined_call_operand.vmem [shape: f32[1,128], index: 2, kind: input, shape index: {}]
  %s3 = inlined_call_operand.hbm [shape: bf16[128,128], index: 3, kind: input, shape index: {}]
  %s4 = inlined_call_operand.vmem [shape: f32[1,128], index: 4, kind: input, shape index: {}]
  %s5 = inlined_call_operand.hbm [shape: bf16[128,128], index: 5, kind: input, shape index: {}]
  %s6 = inlined_call_operand.vmem [shape: f32[1,128], index: 6, kind: input, shape index: {}]
  %s7 = inlined_call_operand.hbm [shape: f32[16,128], index: 7, kind: output, shape index: {}]
  %s8 = sld [smem:[#allocation0]]
  $region77: #{tpu_custom_call.1} parent=0
    _
  %s10 = ssub.s32 1, %s8
  %s11 = scalar_select 0, %s10, %s8
  $region1: #{tpu_custom_call.1} parent=0
    #allocation2 [shape = 'u8[8192]{0}', space=vmem, size = 0x2000, scoped, tag = 'input window, operand 0']
    #allocation3 [shape = 's32[2]{0}', space=sflag, size = 0x8, scoped, tag = 'scoped memory for tpu_custom_call.1']
    #allocation4 [shape = 's32[2]{0}', space=sflag, size = 0x8, scoped, tag = 'scoped memory for tpu_custom_call.1']
    #allocation5 [shape = 'u8[8192]{0}', space=vmem, size = 0x2000, scoped, tag = 'input window, operand 1, single buffered']
    #allocation6 [shape = 's32[1]{0}', space=sflag, size = 0x4, scoped, tag = 'scoped memory for tpu_custom_call.1']
    #allocation7 [shape = 'u8[32768]{0}', space=vmem, size = 0x8000, scoped, tag = 'input window, operand 3, single buffered']
    #allocation8 [shape = 'u8[32768]{0}', space=vmem, size = 0x8000, scoped, tag = 'input window, operand 5, single buffered']
    #allocation9 [shape = 's32[1]{0}', space=sflag, size = 0x4, scoped, tag = 'scoped memory for tpu_custom_call.1']
    #allocation10 [shape = 'u8[8192]{0}', space=vmem, size = 0x2000, scoped, tag = 'output window, operand 0']
    %12 = vsyncpa [#allocation3], 0
    %s13 = scalar_lea.sflag [#allocation3], 1
    %14 = vsyncpa %s13, 0
    %15 = vsyncpa [#allocation6], 0
    %16 = vsyncpa [#allocation9], 0
    %17 = vsyncpa [#allocation4], 0
    %s18 = scalar_lea.sflag [#allocation4], 1
    %19 = vsyncpa %s18, 0
    loop: start=0, step=1, limit=4
    $region2: #{tpu_custom_call.1} parent=1 // loop_pre_header
      _
    $region3: #{tpu_custom_call.1} parent=1 // loop_header
      %s21 = sphi 0, %s25
      %p22 = scmp.ge.s32.totalorder %s21, 4
      %s31 = sphi 0, %s33
      %s34 = sphi 0, %s31
      %s35 = sphi 0, %s34
      %s51 = sphi 0, %s35
      %s55 = sphi 0, %s55
      %s57 = sphi 0, %s55
      %s58 = sphi 0, %s57
      %s72 = sphi 0, %s58
      %s76 = sphi 0, %s76
      %s78 = sphi 0, %s76
      %s79 = sphi 0, %s78
      %s93 = sphi 0, %s79
      %s97 = sphi 0, %s97
      %s99 = sphi 0, %s97
      %s100 = sphi 0, %s99
      %s114 = sphi 0, %s100
      %s118 = sphi 0, %s118
      %s120 = sphi 0, %s118
      %s121 = sphi 0, %s120
      %s135 = sphi 0, %s121
      %s139 = sphi 0, %s139
      %s141 = sphi 0, %s139
      %s142 = sphi 0, %s141
      %s156 = sphi 0, %s142
      %s160 = sphi 0, %s160
      %s162 = sphi 0, %s160
      %s163 = sphi 0, %s162
      %s177 = sphi 0, %s163
      %s183 = sphi 0, %s185
      %s186 = sphi 0, %s183
      %s187 = sphi 0, %s186
      %s203 = sphi 0, %s187
    $region4: #{tpu_custom_call.1} parent=1 // loop_header_branch
      %24 = sbr.rel (%p22) target = $region8
    $region5: #{tpu_custom_call.1} parent=1 // loop_body
      %s26 = ssub.s32 %s21, 1
      %s27 = ssub.s32 %s21, 2
      %s28 = sadd.s32 %s21, 1
      %s29 = ssub.s32 %s21, %s28
      %p30 = scmp.eq.s32.totalorder %s29, 0
      %s32 = sadd.s32 %s31, 1
      %s33 = scalar_select %p30, %s31, %s32
      %p36 = pneg %p30
      %p37 = scmp.eq.s32.totalorder %s21, 1
      %p38 = por %p36, %p37
      %p39 = scmp.ne.s32.totalorder %s31, %s34
      %p40 = scmp.eq.s32.totalorder %s21, 0
      %p41 = por %p39, %p40
      %p42 = scmp.ne.s32.totalorder %s31, %s34
      %p43 = scmp.eq.s32.totalorder %s26, 1
      %p44 = por %p42, %p43
      %p45 = scmp.ne.s32.totalorder %s34, %s35
      %p46 = scmp.eq.s32.totalorder %s26, 0
      %p47 = por %p45, %p46
      %p48 = scmp.ne.s32.totalorder %s34, %s35
      %p49 = scmp.eq.s32.totalorder %s27, 1
      %p50 = por %p48, %p49
      %p52 = scmp.ne.s32.totalorder %s35, %s51
      %p53 = scmp.eq.s32.totalorder %s27, 0
      %p54 = por %p52, %p53
      %s56 = sadd.s32 %s55, 1
      %p59 = scmp.eq.s32.totalorder %s21, 1
      %p60 = scmp.ne.s32.totalorder %s55, %s57
      %p61 = scmp.eq.s32.totalorder %s21, 0
      %p62 = por %p60, %p61
      %p63 = scmp.ne.s32.totalorder %s55, %s57
      %p64 = scmp.eq.s32.totalorder %s26, 1
      %p65 = por %p63, %p64
      %p66 = scmp.ne.s32.totalorder %s57, %s58
      %p67 = scmp.eq.s32.totalorder %s26, 0
      %p68 = por %p66, %p67
      %p69 = scmp.ne.s32.totalorder %s57, %s58
      %p70 = scmp.eq.s32.totalorder %s27, 1
      %p71 = por %p69, %p70
      %p73 = scmp.ne.s32.totalorder %s58, %s72
      %p74 = scmp.eq.s32.totalorder %s27, 0
      %p75 = por %p73, %p74
      %s77 = sadd.s32 %s76, 1
      %p80 = scmp.eq.s32.totalorder %s21, 1
      %p81 = scmp.ne.s32.totalorder %s76, %s78
      %p82 = scmp.eq.s32.totalorder %s21, 0
      %p83 = por %p81, %p82
      %p84 = scmp.ne.s32.totalorder %s76, %s78
      %p85 = scmp.eq.s32.totalorder %s26, 1
      %p86 = por %p84, %p85
      %p87 = scmp.ne.s32.totalorder %s78, %s79
      %p88 = scmp.eq.s32.totalorder %s26, 0
      %p89 = por %p87, %p88
      %p90 = scmp.ne.s32.totalorder %s78, %s79
      %p91 = scmp.eq.s32.totalorder %s27, 1
      %p92 = por %p90, %p91
      %p94 = scmp.ne.s32.totalorder %s79, %s93
      %p95 = scmp.eq.s32.totalorder %s27, 0
      %p96 = por %p94, %p95
      %s98 = sadd.s32 %s97, 1
      %p101 = scmp.eq.s32.totalorder %s21, 1
      %p102 = scmp.ne.s32.totalorder %s97, %s99
      %p103 = scmp.eq.s32.totalorder %s21, 0
      %p104 = por %p102, %p103
      %p105 = scmp.ne.s32.totalorder %s97, %s99
      %p106 = scmp.eq.s32.totalorder %s26, 1
      %p107 = por %p105, %p106
      %p108 = scmp.ne.s32.totalorder %s99, %s100
      %p109 = scmp.eq.s32.totalorder %s26, 0
      %p110 = por %p108, %p109
      %p111 = scmp.ne.s32.totalorder %s99, %s100
      %p112 = scmp.eq.s32.totalorder %s27, 1
      %p113 = por %p111, %p112
      %p115 = scmp.ne.s32.totalorder %s100, %s114
      %p116 = scmp.eq.s32.totalorder %s27, 0
      %p117 = por %p115, %p116
      %s119 = sadd.s32 %s118, 1
      %p122 = scmp.eq.s32.totalorder %s21, 1
      %p123 = scmp.ne.s32.totalorder %s118, %s120
      %p124 = scmp.eq.s32.totalorder %s21, 0
      %p125 = por %p123, %p124
      %p126 = scmp.ne.s32.totalorder %s118, %s120
      %p127 = scmp.eq.s32.totalorder %s26, 1
      %p128 = por %p126, %p127
      %p129 = scmp.ne.s32.totalorder %s120, %s121
      %p130 = scmp.eq.s32.totalorder %s26, 0
      %p131 = por %p129, %p130
      %p132 = scmp.ne.s32.totalorder %s120, %s121
      %p133 = scmp.eq.s32.totalorder %s27, 1
      %p134 = por %p132, %p133
      %p136 = scmp.ne.s32.totalorder %s121, %s135
      %p137 = scmp.eq.s32.totalorder %s27, 0
      %p138 = por %p136, %p137
      %s140 = sadd.s32 %s139, 1
      %p143 = scmp.eq.s32.totalorder %s21, 1
      %p144 = scmp.ne.s32.totalorder %s139, %s141
      %p145 = scmp.eq.s32.totalorder %s21, 0
      %p146 = por %p144, %p145
      %p147 = scmp.ne.s32.totalorder %s139, %s141
      %p148 = scmp.eq.s32.totalorder %s26, 1
      %p149 = por %p147, %p148
      %p150 = scmp.ne.s32.totalorder %s141, %s142
      %p151 = scmp.eq.s32.totalorder %s26, 0
      %p152 = por %p150, %p151
      %p153 = scmp.ne.s32.totalorder %s141, %s142
      %p154 = scmp.eq.s32.totalorder %s27, 1
      %p155 = por %p153, %p154
      %p157 = scmp.ne.s32.totalorder %s142, %s156
      %p158 = scmp.eq.s32.totalorder %s27, 0
      %p159 = por %p157, %p158
      %s161 = sadd.s32 %s160, 1
      %p164 = scmp.eq.s32.totalorder %s21, 1
      %p165 = scmp.ne.s32.totalorder %s160, %s162
      %p166 = scmp.eq.s32.totalorder %s21, 0
      %p167 = por %p165, %p166
      %p168 = scmp.ne.s32.totalorder %s160, %s162
      %p169 = scmp.eq.s32.totalorder %s26, 1
      %p170 = por %p168, %p169
      %p171 = scmp.ne.s32.totalorder %s162, %s163
      %p172 = scmp.eq.s32.totalorder %s26, 0
      %p173 = por %p171, %p172
      %p174 = scmp.ne.s32.totalorder %s162, %s163
      %p175 = scmp.eq.s32.totalorder %s27, 1
      %p176 = por %p174, %p175
      %p178 = scmp.ne.s32.totalorder %s163, %s177
      %p179 = scmp.eq.s32.totalorder %s27, 0
      %p180 = por %p178, %p179
      %s181 = ssub.s32 %s21, %s28
      %p182 = scmp.eq.s32.totalorder %s181, 0
      %s184 = sadd.s32 %s183, 1
      %s185 = scalar_select %p182, %s183, %s184
      %p188 = pneg %p182
      %p189 = scmp.eq.s32.totalorder %s21, 1
      %p190 = por %p188, %p189
      %p191 = scmp.ne.s32.totalorder %s183, %s186
      %p192 = scmp.eq.s32.totalorder %s21, 0
      %p193 = por %p191, %p192
      %p194 = scmp.ne.s32.totalorder %s183, %s186
      %p195 = scmp.eq.s32.totalorder %s26, 1
      %p196 = por %p194, %p195
      %p197 = scmp.ne.s32.totalorder %s186, %s187
      %p198 = scmp.eq.s32.totalorder %s26, 0
      %p199 = por %p197, %p198
      %p200 = scmp.ne.s32.totalorder %s186, %s187
      %p201 = scmp.eq.s32.totalorder %s27, 1
      %p202 = por %p200, %p201
      %p204 = scmp.ne.s32.totalorder %s187, %s203
      %p205 = scmp.eq.s32.totalorder %s27, 0
      %p206 = por %p204, %p205
      %p207 = scmp.le.s32.totalorder 1, %s21
      %p208 = scmp.lt.s32.totalorder %s21, 3
      %p209 = pnand %p207, %p208
      %p210 = pneg %p209
      // Predicated region
      $region9: #{tpu_custom_call.1} parent=5 // pred_check
        _
      $region10: #{tpu_custom_call.1} parent=5 // pred_check_branch
        %212 = sbr.rel (%p209) target = $region12
      $region11: #{tpu_custom_call.1} parent=5 // pred_region
        %s213 = ssub.s32 %s21, 1
        // Predicated region
        $region13: #{tpu_custom_call.1} parent=11 // pred_check
          %p214 = pneg %p68
        $region14: #{tpu_custom_call.1} parent=11 // pred_check_branch
          %216 = sbr.rel (%p214) target = $region16
        $region15: #{tpu_custom_call.1} parent=11 // pred_region
          %218 = vsyncadd [#allocation6], 0
          %s219 = sshll.u32 %s1, 4
          %s220 = int_to_ptr.hbm [resolvable:$true] %s219
          %s221 = sshll.u32 [#allocation5], 4
          %s222 = int_to_ptr.vmem [resolvable:$true] %s221
          %227 = dma.hbm_to_vmem [thread:$0]  %s220, 256, %s222, [#allocation6], 64, 64, 4
        $region16: #{tpu_custom_call.1} parent=11 // pred_fallthru
          _
        // Predicated region
        $region17: #{tpu_custom_call.1} parent=11 // pred_check
          %p228 = pneg %p89
        $region18: #{tpu_custom_call.1} parent=11 // pred_check_branch
          %230 = sbr.rel (%p228) target = $region20
        $region19: #{tpu_custom_call.1} parent=11 // pred_region
          _
        $region20: #{tpu_custom_call.1} parent=11 // pred_fallthru
          _
        // Predicated region
        $region21: #{tpu_custom_call.1} parent=11 // pred_check
          %p231 = pneg %p110
        $region22: #{tpu_custom_call.1} parent=11 // pred_check_branch
          %233 = sbr.rel (%p231) target = $region24
        $region23: #{tpu_custom_call.1} parent=11 // pred_region
          %235 = vsyncadd [#allocation6], 0
          %s236 = sshll.u32 %s3, 4
          %s237 = int_to_ptr.hbm [resolvable:$true] %s236
          %s238 = sshll.u32 [#allocation7], 4
          %s239 = int_to_ptr.vmem [resolvable:$true] %s238
          %244 = dma.hbm_to_vmem [thread:$0]  %s237, 1024, %s239, [#allocation6], 64, 64, 4
        $region24: #{tpu_custom_call.1} parent=11 // pred_fallthru
          _
        // Predicated region
        $region25: #{tpu_custom_call.1} parent=11 // pred_check
          %p245 = pneg %p131
        $region26: #{tpu_custom_call.1} parent=11 // pred_check_branch
          %247 = sbr.rel (%p245) target = $region28
        $region27: #{tpu_custom_call.1} parent=11 // pred_region
          _
        $region28: #{tpu_custom_call.1} parent=11 // pred_fallthru
          _
        // Predicated region
        $region29: #{tpu_custom_call.1} parent=11 // pred_check
          %p248 = pneg %p152
        $region30: #{tpu_custom_call.1} parent=11 // pred_check_branch
          %250 = sbr.rel (%p248) target = $region32
        $region31: #{tpu_custom_call.1} parent=11 // pred_region
          %252 = vsyncadd [#allocation9], 0
          %s253 = sshll.u32 %s5, 4
          %s254 = int_to_ptr.hbm [resolvable:$true] %s253
          %s255 = sshll.u32 [#allocation8], 4
          %s256 = int_to_ptr.vmem [resolvable:$true] %s255
          %261 = dma.hbm_to_vmem [thread:$0]  %s254, 1024, %s256, [#allocation9], 64, 64, 4
        $region32: #{tpu_custom_call.1} parent=11 // pred_fallthru
          _
        // Predicated region
        $region33: #{tpu_custom_call.1} parent=11 // pred_check
          %p262 = pneg %p173
        $region34: #{tpu_custom_call.1} parent=11 // pred_check_branch
          %264 = sbr.rel (%p262) target = $region36
        $region35: #{tpu_custom_call.1} parent=11 // pred_region
          _
        $region36: #{tpu_custom_call.1} parent=11 // pred_fallthru
          _
      $region12: #{tpu_custom_call.1} parent=5 // pred_fallthru
        _
      %p265 = scmp.lt.s32.totalorder %s21, 2
      // Predicated region
      $region37: #{tpu_custom_call.1} parent=5 // pred_check
        %p266 = pneg %p265
      $region38: #{tpu_custom_call.1} parent=5 // pred_check_branch
        %268 = sbr.rel (%p266) target = $region40
      $region39: #{tpu_custom_call.1} parent=5 // pred_region
        // Predicated region
        $region41: #{tpu_custom_call.1} parent=39 // pred_check
          %p269 = pneg %p41
        $region42: #{tpu_custom_call.1} parent=39 // pred_check_branch
          %271 = sbr.rel (%p269) target = $region44
        $region43: #{tpu_custom_call.1} parent=39 // pred_region
          %s272 = sand.u32 %s31, 1
          %s273 = scalar_lea.sflag [#allocation3], %s272
          %s274 = sand.u32 %s31, 1
          %s275 = smul.addr %s274, 8
          %s276 = scalar_lea.vmem [#allocation2], %s275
          %278 = vsyncadd %s273, 0
          %s279 = smul.addr %s21, 8
          %s280 = scalar_lea.hbm %s0, %s279
          %s282 = sshll.u32 %s280, 4
          %s283 = int_to_ptr.hbm [resolvable:$true] %s282
          %s284 = sshll.u32 %s276, 4
          %s285 = int_to_ptr.vmem [resolvable:$true] %s284
          %287 = dma.hbm_to_vmem [thread:$0]  %s283, 128, %s285, %s273
        $region44: #{tpu_custom_call.1} parent=39 // pred_fallthru
          _
      $region40: #{tpu_custom_call.1} parent=5 // pred_fallthru
        _
      %p288 = scmp.le.s32.totalorder 1, %s21
      %p289 = scmp.lt.s32.totalorder %s21, 3
      %p290 = pnand %p288, %p289
      %p291 = pneg %p290
      // Predicated region
      $region45: #{tpu_custom_call.1} parent=5 // pred_check
        _
      $region46: #{tpu_custom_call.1} parent=5 // pred_check_branch
        %293 = sbr.rel (%p290) target = $region48
      $region47: #{tpu_custom_call.1} parent=5 // pred_region
        %s294 = ssub.s32 %s21, 1
        %s295 = sand.u32 %s34, 1
        %s296 = scalar_lea.sflag [#allocation3], %s295
        %s297 = sand.u32 %s34, 1
        %s298 = smul.addr %s297, 8
        %s299 = scalar_lea.vmem [#allocation2], %s298
        // Predicated region
        $region49: #{tpu_custom_call.1} parent=47 // pred_check
          %p300 = pneg %p47
        $region50: #{tpu_custom_call.1} parent=47 // pred_check_branch
          %302 = sbr.rel (%p300) target = $region52
        $region51: #{tpu_custom_call.1} parent=47 // pred_region
          %304 = dma.done %s296, 128
        $region52: #{tpu_custom_call.1} parent=47 // pred_fallthru
          _
        // Predicated region
        $region53: #{tpu_custom_call.1} parent=47 // pred_check
          %p305 = pneg %p68
        $region54: #{tpu_custom_call.1} parent=47 // pred_check_branch
          %307 = sbr.rel (%p305) target = $region56
        $region55: #{tpu_custom_call.1} parent=47 // pred_region
          %309 = dma.done [#allocation6], 256
        $region56: #{tpu_custom_call.1} parent=47 // pred_fallthru
          _
        // Predicated region
        $region57: #{tpu_custom_call.1} parent=47 // pred_check
          %p310 = pneg %p110
        $region58: #{tpu_custom_call.1} parent=47 // pred_check_branch
          %312 = sbr.rel (%p310) target = $region60
        $region59: #{tpu_custom_call.1} parent=47 // pred_region
          %314 = dma.done [#allocation6], 1024
        $region60: #{tpu_custom_call.1} parent=47 // pred_fallthru
          _
        // Predicated region
        $region61: #{tpu_custom_call.1} parent=47 // pred_check
          %p315 = pneg %p152
        $region62: #{tpu_custom_call.1} parent=47 // pred_check_branch
          %317 = sbr.rel (%p315) target = $region64
        $region63: #{tpu_custom_call.1} parent=47 // pred_region
          %319 = dma.done [#allocation9], 1024
        $region64: #{tpu_custom_call.1} parent=47 // pred_fallthru
          _
        %s320 = sand.u32 %s34, 1
        %s321 = scalar_lea.sflag [#allocation3], %s320
        %s322 = sand.u32 %s34, 1
        %s323 = smul.addr %s322, 8
        %s324 = scalar_lea.vmem [#allocation2], %s323
        %p325 = pneg %p47
        %p326 = pneg %p44
        %p327 = pneg %p68
        %p328 = pneg %p65
        %p329 = pneg %p89
        %p330 = pneg %p86
        %p331 = pneg %p110
        %p332 = pneg %p107
        %p333 = pneg %p131
        %p334 = pneg %p128
        %p335 = pneg %p152
        %p336 = pneg %p149
        %p337 = pneg %p173
        %p338 = pneg %p170
        %p339 = pneg %p199
        %p340 = pneg %p196
        %s341 = sand.u32 %s186, 1
        %s342 = scalar_lea.sflag [#allocation4], %s341
        %s343 = sand.u32 %s186, 1
        %s344 = smul.addr %s343, 8
        %s345 = scalar_lea.vmem [#allocation10], %s344
        %v347 = vld [vmem:[%s299] sm:$0xff]
        %v348 = vpack.c.bf16 %v347, %v347
        %v349 = vld [vmem:[#allocation5] sm:$0xf]
        %v350 = vld [vmem:[#allocation5 + $0x4] sm:$0xf]
        %v351 = vld [vmem:[#allocation5 + $0x8] sm:$0xf]
        %v352 = vld [vmem:[#allocation5 + $0xc] sm:$0xf]
        %v353 = vld [vmem:[%s2] sm:$0x1]
        %v355 = vperm.slane %v353, 0
        %v361 = vunpack.c.l.b16 %v349
        %v362 = vunpack.c.l.b16 %v350
        %v363 = vunpack.c.l.b16 %v351
        %v364 = vunpack.c.l.b16 %v352
        %v365 = vpack.c.b16 %v362, %v361
        %v366 = vpack.c.b16 %v364, %v363
        %vm369 = vcmask 261120
        %v371 = vsel %vm369, %v348, 0
        %373 = vmatpush.bf16.msra.mxu0 0
        %374 = vmatpush.bf16.msra.mxu0 0
        %375 = vmatpush.bf16.msra.mxu0 0
        %376 = vmatpush.bf16.msra.mxu0 0
        %377 = vmatpush.bf16.msra.mxu0 0
        %378 = vmatpush.bf16.msra.mxu0 0
        %379 = vmatpush.bf16.msra.mxu0 %v366
        %380 = vmatpush.bf16.msra.mxu0 %v365
        %381 = vmatmul.bf16.gmra.mxu0 %v371
        %v382 = vpop.f32.mrf.mxu0
        %v383 = vadd.f32 %v355, %v382
        %v384 = vpop.f32.mrf.mxu0
        %385 = vdwg.mxu0
        %v386 = vmax.f32 %v383, 0.0
        %v387 = vpack.c.bf16 %v386, %v386
        %v388 = vld [vmem:[#allocation7] sm:$0xf]
        %v389 = vld [vmem:[#allocation7 + $0x4] sm:$0xf]
        %v390 = vld [vmem:[#allocation7 + $0x8] sm:$0xf]
        %v391 = vld [vmem:[#allocation7 + $0xc] sm:$0xf]
        %v392 = vld [vmem:[#allocation7 + $0x10] sm:$0xf]
        %v393 = vld [vmem:[#allocation7 + $0x14] sm:$0xf]
        %v394 = vld [vmem:[#allocation7 + $0x18] sm:$0xf]
        %v395 = vld [vmem:[#allocation7 + $0x1c] sm:$0xf]
        %v396 = vld [vmem:[#allocation7 + $0x20] sm:$0xf]
        %v397 = vld [vmem:[#allocation7 + $0x24] sm:$0xf]
        %v398 = vld [vmem:[#allocation7 + $0x28] sm:$0xf]
        %v399 = vld [vmem:[#allocation7 + $0x2c] sm:$0xf]
        %v400 = vld [vmem:[#allocation7 + $0x30] sm:$0xf]
        %v401 = vld [vmem:[#allocation7 + $0x34] sm:$0xf]
        %v402 = vld [vmem:[#allocation7 + $0x38] sm:$0xf]
        %v403 = vld [vmem:[#allocation7 + $0x3c] sm:$0xf]
        %v404 = vld [vmem:[%s4] sm:$0x1]
        %v406 = vperm.slane %v404, 0
        %v424 = vunpack.c.l.b16 %v388
        %v425 = vunpack.c.l.b16 %v389
        %v426 = vunpack.c.l.b16 %v390
        %v427 = vunpack.c.l.b16 %v391
        %v428 = vunpack.c.l.b16 %v392
        %v429 = vunpack.c.l.b16 %v393
        %v430 = vunpack.c.l.b16 %v394
        %v431 = vunpack.c.l.b16 %v395
        %v432 = vunpack.c.l.b16 %v396
        %v433 = vunpack.c.l.b16 %v397
        %v434 = vunpack.c.l.b16 %v398
        %v435 = vunpack.c.l.b16 %v399
        %v436 = vunpack.c.l.b16 %v400
        %v437 = vunpack.c.l.b16 %v401
        %v438 = vunpack.c.l.b16 %v402
        %v439 = vunpack.c.l.b16 %v403
        %v440 = vpack.c.b16 %v425, %v424
        %v441 = vpack.c.b16 %v427, %v426
        %v442 = vpack.c.b16 %v429, %v428
        %v443 = vpack.c.b16 %v431, %v430
        %v444 = vpack.c.b16 %v433, %v432
        %v445 = vpack.c.b16 %v435, %v434
        %v446 = vpack.c.b16 %v437, %v436
        %v447 = vpack.c.b16 %v439, %v438
        %456 = vmatpush.bf16.msra.mxu0 %v447
        %457 = vmatpush.bf16.msra.mxu0 %v446
        %458 = vmatpush.bf16.msra.mxu0 %v445
        %459 = vmatpush.bf16.msra.mxu0 %v444
        %460 = vmatpush.bf16.msra.mxu0 %v443
        %461 = vmatpush.bf16.msra.mxu0 %v442
        %462 = vmatpush.bf16.msra.mxu0 %v441
        %463 = vmatpush.bf16.msra.mxu0 %v440
        %464 = vmatmul.bf16.gmra.mxu0 %v387
        %v465 = vpop.f32.mrf.mxu0
        %v466 = vadd.f32 %v406, %v465
        %v467 = vpop.f32.mrf.mxu0
        %468 = vdwg.mxu0
        %v469 = vmax.f32 %v466, 0.0
        %v470 = vpack.c.bf16 %v469, %v469
        %v471 = vld [vmem:[#allocation8] sm:$0xf]
        %v472 = vld [vmem:[#allocation8 + $0x4] sm:$0xf]
        %v473 = vld [vmem:[#allocation8 + $0x8] sm:$0xf]
        %v474 = vld [vmem:[#allocation8 + $0xc] sm:$0xf]
        %v475 = vld [vmem:[#allocation8 + $0x10] sm:$0xf]
        %v476 = vld [vmem:[#allocation8 + $0x14] sm:$0xf]
        %v477 = vld [vmem:[#allocation8 + $0x18] sm:$0xf]
        %v478 = vld [vmem:[#allocation8 + $0x1c] sm:$0xf]
        %v479 = vld [vmem:[#allocation8 + $0x20] sm:$0xf]
        %v480 = vld [vmem:[#allocation8 + $0x24] sm:$0xf]
        %v481 = vld [vmem:[#allocation8 + $0x28] sm:$0xf]
        %v482 = vld [vmem:[#allocation8 + $0x2c] sm:$0xf]
        %v483 = vld [vmem:[#allocation8 + $0x30] sm:$0xf]
        %v484 = vld [vmem:[#allocation8 + $0x34] sm:$0xf]
        %v485 = vld [vmem:[#allocation8 + $0x38] sm:$0xf]
        %v486 = vld [vmem:[#allocation8 + $0x3c] sm:$0xf]
        %v487 = vld [vmem:[%s6] sm:$0x1]
        %v489 = vperm.slane %v487, 0
        %v507 = vunpack.c.l.b16 %v471
        %v508 = vunpack.c.l.b16 %v472
        %v509 = vunpack.c.l.b16 %v473
        %v510 = vunpack.c.l.b16 %v474
        %v511 = vunpack.c.l.b16 %v475
        %v512 = vunpack.c.l.b16 %v476
        %v513 = vunpack.c.l.b16 %v477
        %v514 = vunpack.c.l.b16 %v478
        %v515 = vunpack.c.l.b16 %v479
        %v516 = vunpack.c.l.b16 %v480
        %v517 = vunpack.c.l.b16 %v481
        %v518 = vunpack.c.l.b16 %v482
        %v519 = vunpack.c.l.b16 %v483
        %v520 = vunpack.c.l.b16 %v484
        %v521 = vunpack.c.l.b16 %v485
        %v522 = vunpack.c.l.b16 %v486
        %v523 = vpack.c.b16 %v508, %v507
        %v524 = vpack.c.b16 %v510, %v509
        %v525 = vpack.c.b16 %v512, %v511
        %v526 = vpack.c.b16 %v514, %v513
        %v527 = vpack.c.b16 %v516, %v515
        %v528 = vpack.c.b16 %v518, %v517
        %v529 = vpack.c.b16 %v520, %v519
        %v530 = vpack.c.b16 %v522, %v521
        %539 = vmatpush.bf16.msra.mxu0 %v530
        %540 = vmatpush.bf16.msra.mxu0 %v529
        %541 = vmatpush.bf16.msra.mxu0 %v528
        %542 = vmatpush.bf16.msra.mxu0 %v527
        %543 = vmatpush.bf16.msra.mxu0 %v526
        %544 = vmatpush.bf16.msra.mxu0 %v525
        %545 = vmatpush.bf16.msra.mxu0 %v524
        %546 = vmatpush.bf16.msra.mxu0 %v523
        %547 = vmatmul.bf16.gmra.mxu0 %v470
        %v548 = vpop.f32.mrf.mxu0
        %v549 = vadd.f32 %v489, %v548
        %v550 = vpop.f32.mrf.mxu0
        %551 = vdwg.mxu0
        %552 = vst [vmem:[%s345] sm:$0xff] %v549
        %s553 = sand.u32 %s186, 1
        %s554 = scalar_lea.sflag [#allocation4], %s553
        %s555 = sand.u32 %s186, 1
        %s556 = smul.addr %s555, 8
        %s557 = scalar_lea.vmem [#allocation10], %s556
        // Predicated region
        $region65: #{tpu_custom_call.1} parent=47 // pred_check
          %p558 = pneg %p196
        $region66: #{tpu_custom_call.1} parent=47 // pred_check_branch
          %560 = sbr.rel (%p558) target = $region68
        $region67: #{tpu_custom_call.1} parent=47 // pred_region
          %562 = vsyncadd %s554, 0
          %s563 = smul.addr %s26, 8
          %s564 = scalar_lea.hbm %s7, %s563
          %s566 = sshll.u32 %s557, 4
          %s567 = int_to_ptr.vmem [resolvable:$true] %s566
          %s568 = sshll.u32 %s564, 4
          %s569 = int_to_ptr.hbm [resolvable:$true] %s568
          %571 = dma.vmem_to_hbm [thread:$0]  %s567, 128, %s569, %s554
        $region68: #{tpu_custom_call.1} parent=47 // pred_fallthru
          _
      $region48: #{tpu_custom_call.1} parent=5 // pred_fallthru
        _
      %p572 = scmp.le.s32.totalorder 2, %s21
      // Predicated region
      $region69: #{tpu_custom_call.1} parent=5 // pred_check
        %p573 = pneg %p572
      $region70: #{tpu_custom_call.1} parent=5 // pred_check_branch
        %575 = sbr.rel (%p573) target = $region72
      $region71: #{tpu_custom_call.1} parent=5 // pred_region
        %s576 = ssub.s32 %s21, 2
        // Predicated region
        $region73: #{tpu_custom_call.1} parent=71 // pred_check
          %p577 = pneg %p202
        $region74: #{tpu_custom_call.1} parent=71 // pred_check_branch
          %579 = sbr.rel (%p577) target = $region76
        $region75: #{tpu_custom_call.1} parent=71 // pred_region
          %s580 = sand.u32 %s187, 1
          %s581 = scalar_lea.sflag [#allocation4], %s580
          %s582 = sand.u32 %s187, 1
          %s583 = smul.addr %s582, 8
          %s584 = scalar_lea.vmem [#allocation10], %s583
          %586 = dma.done %s581, 128
        $region76: #{tpu_custom_call.1} parent=71 // pred_fallthru
          _
      $region72: #{tpu_custom_call.1} parent=5 // pred_fallthru
        _
    $region6: #{tpu_custom_call.1} parent=1 // loop_footer
      %s25 = sadd.s32 1, %s21
    $region7: #{tpu_custom_call.1} parent=1 // loop_footer_branch
      %20 = sbr.rel target = $region3
    $region8: #{tpu_custom_call.1} parent=1 // loop_exit
      _
    %587 = vsyncpa [#allocation3], 1
    %s588 = scalar_lea.sflag [#allocation3], 1
    %589 = vsyncpa %s588, 1
    %590 = vsyncpa [#allocation6], 1
    %591 = vsyncpa [#allocation9], 1
    %592 = vsyncpa [#allocation4], 1
    %s593 = scalar_lea.sflag [#allocation4], 1
    %594 = vsyncpa %s593, 1

</llo_original>
